<compile_context>
chip_gen: v6e
topology: v6e:2x2x1
jax: 0.10.0
libtpu: 0.0.40
codegen_flags: <defaults>
</compile_context>

<pallas_src>
import jax
import jax.numpy as jnp
from jax.experimental import pallas as pl
from jax.experimental.pallas import tpu as pltpu

NEG_SLOPE = 0.01   # nn.LeakyReLU default negative_slope
LANE = 128
SUBLANE = 8


def _dense_kernel(x_ref, w_ref, o_ref):
    # x_ref: (TB, in_size)  w_ref: (in_size, n_pad)  o_ref: (TB, n_pad)
    h = jnp.dot(x_ref[...], w_ref[...], preferred_element_type=jnp.float32)
    # LeakyReLU with 0 < slope < 1:  max(h, slope*h)
    o_ref[...] = jnp.maximum(h, NEG_SLOPE * h).astype(o_ref.dtype)


def _round_up(x, m):
    return ((x + m - 1) // m) * m


def dense_forward(x, w, *, in_size, out_size, block_rows=512):
    """PyTorch Dense.forward.

    x: any shape whose element count is divisible by in_size (torch .view(-1, in_size)).
    w: PyTorch nn.Linear weight layout (out_size, in_size), bias=False.
    Returns (rows, out_size) float32.
    """
    xf = x.reshape(-1, in_size).astype(jnp.float32)
    rows = xf.shape[0]

    # Lane-dense N: pad out_size up to a multiple of 128 so stores are full vst.
    n_pad = _round_up(out_size, LANE)
    wt = jnp.zeros((in_size, n_pad), jnp.float32).at[:, :out_size].set(
        w.astype(jnp.float32).T)

    # Tile the batch: TB in the 512-row range (cap at padded batch for tiny
    # inputs). TB is always a multiple of 8 (sublane), n_pad a multiple of 128,
    # so all BlockSpecs satisfy the (8, 128) constraint. With TB=512 the
    # double-buffered x tiles are a few MiB, safely inside v7x's 64 MiB VMEM.
    tb = min(block_rows, _round_up(rows, SUBLANE))
    rows_pad = _round_up(rows, tb)
    if rows_pad != rows:
        xf = jnp.pad(xf, ((0, rows_pad - rows), (0, 0)))
    grid = (rows_pad // tb,)

    out = pl.pallas_call(
        _dense_kernel,
        out_shape=jax.ShapeDtypeStruct((rows_pad, n_pad), jnp.float32),
        grid_spec=pltpu.PrefetchScalarGridSpec(
            num_scalar_prefetch=0,
            grid=grid,
            in_specs=[
                # x streams block-by-block over the batch axis.
                pl.BlockSpec((tb, in_size), lambda i: (i, 0)),
                # weight: constant index_map -> stays resident in VMEM.
                pl.BlockSpec((in_size, n_pad), lambda i: (0, 0)),
            ],
            out_specs=pl.BlockSpec((tb, n_pad), lambda i: (i, 0)),
        ),
        compiler_params=pltpu.CompilerParams(
            # Independent batch axis: megacore sharding on v7x, neutral elsewhere.
            dimension_semantics=("parallel",),
        ),
    )(xf, wt)

    return out[:rows, :out_size]


def _init_weight(key, in_size, out_size):
    # nn.Linear default init (bias=False), PyTorch layout (out, in).
    bound = 1.0 / jnp.sqrt(in_size)
    return jax.random.uniform(key, (out_size, in_size), jnp.float32,
                              minval=-bound, maxval=bound)


if __name__ == "__main__":
    key = jax.random.PRNGKey(0)
    kx, kw = jax.random.split(key)

    # Small shapes: x (2, 4, 16, 16), in_size = 4*16*16 = 1024, out_size = 32.
    batch, ch, sp = 2, 4, 16
    in_size = ch * sp * sp
    out_size = 32

    x = jax.random.normal(kx, (batch, ch, sp, sp), jnp.float32)
    w = _init_weight(kw, in_size, out_size)

    out = dense_forward(x, w, in_size=in_size, out_size=out_size)
    out = jax.block_until_ready(out)

    # Pure-JAX reference (same math as the PyTorch module).
    xf = x.reshape(-1, in_size)
    ref = xf @ w.T
    ref = jnp.where(ref >= 0, ref, NEG_SLOPE * ref)

    assert out.shape == (batch, out_size)
    assert jnp.allclose(out, ref, atol=2e-5, rtol=2e-5)

    print("KERNEL_OK")
</pallas_src>

<mosaic_0001>
module attributes {stable_mosaic.version = 11 : i64} {
  func.func @_dense_kernel(%arg0: i32, %arg1: memref<8x1024xf32, #tpu.memory_space<vmem>>, %arg2: memref<1024x128xf32, #tpu.memory_space<vmem>>, %arg3: memref<8x128xf32, #tpu.memory_space<vmem>>) attributes {dimension_semantics = [#tpu.dimension_semantics<parallel>], iteration_bounds = array<i64: 1>, scalar_prefetch = 0 : i64, scratch_operands = 0 : i64, tpu.core_type = #tpu.core_type<tc>, window_params = [{transform_indices = @transform_0, window_bounds = array<i64: 8, 1024>}, {pipeline_mode = #tpu.pipeline_mode<synchronous>, transform_indices = @transform_1, window_bounds = array<i64: 1024, 128>}, {transform_indices = @transform_2, window_bounds = array<i64: 8, 128>}]} {
    %c0 = arith.constant 0 : index
    %c0_0 = arith.constant 0 : index
    %0 = vector.load %arg1[%c0, %c0_0] : memref<8x1024xf32, #tpu.memory_space<vmem>>, vector<8x1024xf32>
    %c0_1 = arith.constant 0 : index
    %c0_2 = arith.constant 0 : index
    %1 = vector.load %arg2[%c0_1, %c0_2] : memref<1024x128xf32, #tpu.memory_space<vmem>>, vector<1024x128xf32>
    %cst = arith.constant dense<0.000000e+00> : vector<8x128xf32>
    %2 = tpu.matmul %0, %1, %cst {dimension_numbers = #tpu.dot_dimension_numbers<[1], [0], [0], [1], [0, 0, 1, 1], [], []>} : vector<8x1024xf32>, vector<1024x128xf32>, vector<8x128xf32> -> vector<8x128xf32>
    %cst_3 = arith.constant 0.00999999977 : f32
    %3 = vector.broadcast %cst_3 : f32 to vector<8x128xf32>
    %4 = arith.mulf %3, %2 : vector<8x128xf32>
    %5 = arith.maximumf %2, %4 : vector<8x128xf32>
    %c0_4 = arith.constant 0 : index
    %c0_5 = arith.constant 0 : index
    %6 = vector.load %arg3[%c0_4, %c0_5] : memref<8x128xf32, #tpu.memory_space<vmem>>, vector<8x128xf32>
    tpu.vector_store %arg3[%c0_4, %c0_5], %5 {strides = array<i32>} : memref<8x128xf32, #tpu.memory_space<vmem>>, vector<8x128xf32>,
    return
  }
  func.func @transform_0(%arg0: i32) -> (i32, i32) {
    %c0_i32 = arith.constant 0 : i32
    %c0_i32_0 = arith.constant 0 : i32
    return %arg0, %c0_i32 : i32, i32
  }
  func.func @transform_1(%arg0: i32) -> (i32, i32) {
    %c0_i32 = arith.constant 0 : i32
    %c0_i32_0 = arith.constant 0 : i32
    %c0_i32_1 = arith.constant 0 : i32
    return %c0_i32, %c0_i32_0 : i32, i32
  }
  func.func @transform_2(%arg0: i32) -> (i32, i32) {
    %c0_i32 = arith.constant 0 : i32
    %c0_i32_0 = arith.constant 0 : i32
    return %arg0, %c0_i32 : i32, i32
  }
}

</mosaic_0001>

<llo_original>
// kernel: tpu_custom_call.1
$region0: #{tpu_custom_call.1}
  #allocation0 [shape = 'u32[]', space=smem, size = 0x4, offset = 0x4, fixed_abs, tag = 'smem constant byte address 0x4 - core index']
  #allocation1 [shape = 'u32[144,128]{1,0:T(1,128)}', space=vmem, size = 0x12000, scoped, tag = 'internal scratch']
  %s0 = inlined_call_operand.hbm [shape: f32[8,1024], index: 0, kind: input, shape index: {}]
  %s1 = inlined_call_operand.hbm [shape: f32[1024,128], index: 1, kind: input, shape index: {}]
  %s2 = inlined_call_operand.hbm [shape: f32[8,128], index: 2, kind: output, shape index: {}]
  %s3 = sld [smem:[#allocation0]]
  $region26: #{tpu_custom_call.1} parent=0
    _
  %s5 = ssub.s32 1, %s3
  %s6 = scalar_select 0, %s5, %s3
  $region1: #{tpu_custom_call.1} parent=0
    #allocation2 [shape = 'u8[32768]{0}', space=vmem, size = 0x8000, scoped, tag = 'input window, operand 0, single buffered']
    #allocation3 [shape = 's32[1]{0}', space=sflag, size = 0x4, scoped, tag = 'scoped memory for tpu_custom_call.1']
    #allocation4 [shape = 's32[1]{0}', space=sflag, size = 0x4, scoped, tag = 'scoped memory for tpu_custom_call.1']
    #allocation5 [shape = 'u8[524288]{0}', space=vmem, size = 0x80000, scoped, tag = 'input window, operand 1, single buffered']
    #allocation6 [shape = 's32[1]{0}', space=sflag, size = 0x4, scoped, tag = 'scoped memory for tpu_custom_call.1']
    #allocation7 [shape = 'u8[4096]{0}', space=vmem, size = 0x1000, scoped, tag = 'output window, operand 0, single buffered']
    %7 = vsyncpa [#allocation3], 0
    %8 = vsyncpa [#allocation6], 0
    %9 = vsyncpa [#allocation4], 0
    // Predicated region
    $region2: #{tpu_custom_call.1} parent=1 // pred_check
      _
    $region3: #{tpu_custom_call.1} parent=1 // pred_check_branch
      %11 = sbr.rel (0) target = $region5
    $region4: #{tpu_custom_call.1} parent=1 // pred_region
      %s13 = ssub.s32 1024, 1024
      %14 = vsyncadd [#allocation3], %s13
      %s16 = sshll.u32 [#allocation2], 4
      %s17 = int_to_ptr.vmem [resolvable:$true] %s16
      %19 = dma.hbm_to_vmem [thread:$0]  %s0, 1024, %s17, [#allocation3]
    $region5: #{tpu_custom_call.1} parent=1 // pred_fallthru
      _
    // Predicated region
    $region6: #{tpu_custom_call.1} parent=1 // pred_check
      _
    $region7: #{tpu_custom_call.1} parent=1 // pred_check_branch
      %21 = sbr.rel (0) target = $region9
    $region8: #{tpu_custom_call.1} parent=1 // pred_region
      %s23 = ssub.s32 16384, 16384
      %24 = vsyncadd [#allocation6], %s23
      %s25 = sshll.u32 [#allocation5], 4
      %s26 = int_to_ptr.vmem [resolvable:$true] %s25
      %31 = dma.hbm_to_vmem [thread:$0]  %s1, 16384, %s26, [#allocation6], 128, 128, 8
    $region9: #{tpu_custom_call.1} parent=1 // pred_fallthru
      _
    // Predicated region
    $region10: #{tpu_custom_call.1} parent=1 // pred_check
      _
    $region11: #{tpu_custom_call.1} parent=1 // pred_check_branch
      %33 = sbr.rel (0) target = $region13
    $region12: #{tpu_custom_call.1} parent=1 // pred_region
      %34 = dma.done [#allocation3], 1024
    $region13: #{tpu_custom_call.1} parent=1 // pred_fallthru
      _
    // Predicated region
    $region14: #{tpu_custom_call.1} parent=1 // pred_check
      _
    $region15: #{tpu_custom_call.1} parent=1 // pred_check_branch
      %36 = sbr.rel (0) target = $region17
    $region16: #{tpu_custom_call.1} parent=1 // pred_region
      %37 = dma.done [#allocation6], 16384
    $region17: #{tpu_custom_call.1} parent=1 // pred_fallthru
      _
    %v38 = vld [vmem:[#allocation2] sm:$0xff]
    %v39 = vld [vmem:[#allocation2 + $0x8] sm:$0xff]
    %v40 = vld [vmem:[#allocation2 + $0x10] sm:$0xff]
    %v41 = vld [vmem:[#allocation2 + $0x18] sm:$0xff]
    %v42 = vld [vmem:[#allocation2 + $0x20] sm:$0xff]
    %v43 = vld [vmem:[#allocation2 + $0x28] sm:$0xff]
    %v44 = vld [vmem:[#allocation2 + $0x30] sm:$0xff]
    %v45 = vld [vmem:[#allocation2 + $0x38] sm:$0xff]
    %v46 = vld [vmem:[#allocation5] sm:$0xff]
    %v47 = vld [vmem:[#allocation5 + $0x8] sm:$0xff]
    %v48 = vld [vmem:[#allocation5 + $0x10] sm:$0xff]
    %v49 = vld [vmem:[#allocation5 + $0x18] sm:$0xff]
    %v50 = vld [vmem:[#allocation5 + $0x20] sm:$0xff]
    %v51 = vld [vmem:[#allocation5 + $0x28] sm:$0xff]
    %v52 = vld [vmem:[#allocation5 + $0x30] sm:$0xff]
    %v53 = vld [vmem:[#allocation5 + $0x38] sm:$0xff]
    %v54 = vld [vmem:[#allocation5 + $0x40] sm:$0xff]
    %v55 = vld [vmem:[#allocation5 + $0x48] sm:$0xff]
    %v56 = vld [vmem:[#allocation5 + $0x50] sm:$0xff]
    %v57 = vld [vmem:[#allocation5 + $0x58] sm:$0xff]
    %v58 = vld [vmem:[#allocation5 + $0x60] sm:$0xff]
    %v59 = vld [vmem:[#allocation5 + $0x68] sm:$0xff]
    %v60 = vld [vmem:[#allocation5 + $0x70] sm:$0xff]
    %v61 = vld [vmem:[#allocation5 + $0x78] sm:$0xff]
    %v62 = vld [vmem:[#allocation5 + $0x80] sm:$0xff]
    %v63 = vld [vmem:[#allocation5 + $0x88] sm:$0xff]
    %v64 = vld [vmem:[#allocation5 + $0x90] sm:$0xff]
    %v65 = vld [vmem:[#allocation5 + $0x98] sm:$0xff]
    %v66 = vld [vmem:[#allocation5 + $0xa0] sm:$0xff]
    %v67 = vld [vmem:[#allocation5 + $0xa8] sm:$0xff]
    %v68 = vld [vmem:[#allocation5 + $0xb0] sm:$0xff]
    %v69 = vld [vmem:[#allocation5 + $0xb8] sm:$0xff]
    %v70 = vld [vmem:[#allocation5 + $0xc0] sm:$0xff]
    %v71 = vld [vmem:[#allocation5 + $0xc8] sm:$0xff]
    %v72 = vld [vmem:[#allocation5 + $0xd0] sm:$0xff]
    %v73 = vld [vmem:[#allocation5 + $0xd8] sm:$0xff]
    %v74 = vld [vmem:[#allocation5 + $0xe0] sm:$0xff]
    %v75 = vld [vmem:[#allocation5 + $0xe8] sm:$0xff]
    %v76 = vld [vmem:[#allocation5 + $0xf0] sm:$0xff]
    %v77 = vld [vmem:[#allocation5 + $0xf8] sm:$0xff]
    %v78 = vld [vmem:[#allocation5 + $0x100] sm:$0xff]
    %v79 = vld [vmem:[#allocation5 + $0x108] sm:$0xff]
    %v80 = vld [vmem:[#allocation5 + $0x110] sm:$0xff]
    %v81 = vld [vmem:[#allocation5 + $0x118] sm:$0xff]
    %v82 = vld [vmem:[#allocation5 + $0x120] sm:$0xff]
    %v83 = vld [vmem:[#allocation5 + $0x128] sm:$0xff]
    %v84 = vld [vmem:[#allocation5 + $0x130] sm:$0xff]
    %v85 = vld [vmem:[#allocation5 + $0x138] sm:$0xff]
    %v86 = vld [vmem:[#allocation5 + $0x140] sm:$0xff]
    %v87 = vld [vmem:[#allocation5 + $0x148] sm:$0xff]
    %v88 = vld [vmem:[#allocation5 + $0x150] sm:$0xff]
    %v89 = vld [vmem:[#allocation5 + $0x158] sm:$0xff]
    %v90 = vld [vmem:[#allocation5 + $0x160] sm:$0xff]
    %v91 = vld [vmem:[#allocation5 + $0x168] sm:$0xff]
    %v92 = vld [vmem:[#allocation5 + $0x170] sm:$0xff]
    %v93 = vld [vmem:[#allocation5 + $0x178] sm:$0xff]
    %v94 = vld [vmem:[#allocation5 + $0x180] sm:$0xff]
    %v95 = vld [vmem:[#allocation5 + $0x188] sm:$0xff]
    %v96 = vld [vmem:[#allocation5 + $0x190] sm:$0xff]
    %v97 = vld [vmem:[#allocation5 + $0x198] sm:$0xff]
    %v98 = vld [vmem:[#allocation5 + $0x1a0] sm:$0xff]
    %v99 = vld [vmem:[#allocation5 + $0x1a8] sm:$0xff]
    %v100 = vld [vmem:[#allocation5 + $0x1b0] sm:$0xff]
    %v101 = vld [vmem:[#allocation5 + $0x1b8] sm:$0xff]
    %v102 = vld [vmem:[#allocation5 + $0x1c0] sm:$0xff]
    %v103 = vld [vmem:[#allocation5 + $0x1c8] sm:$0xff]
    %v104 = vld [vmem:[#allocation5 + $0x1d0] sm:$0xff]
    %v105 = vld [vmem:[#allocation5 + $0x1d8] sm:$0xff]
    %v106 = vld [vmem:[#allocation5 + $0x1e0] sm:$0xff]
    %v107 = vld [vmem:[#allocation5 + $0x1e8] sm:$0xff]
    %v108 = vld [vmem:[#allocation5 + $0x1f0] sm:$0xff]
    %v109 = vld [vmem:[#allocation5 + $0x1f8] sm:$0xff]
    %v110 = vld [vmem:[#allocation5 + $0x200] sm:$0xff]
    %v111 = vld [vmem:[#allocation5 + $0x208] sm:$0xff]
    %v112 = vld [vmem:[#allocation5 + $0x210] sm:$0xff]
    %v113 = vld [vmem:[#allocation5 + $0x218] sm:$0xff]
    %v114 = vld [vmem:[#allocation5 + $0x220] sm:$0xff]
    %v115 = vld [vmem:[#allocation5 + $0x228] sm:$0xff]
    %v116 = vld [vmem:[#allocation5 + $0x230] sm:$0xff]
    %v117 = vld [vmem:[#allocation5 + $0x238] sm:$0xff]
    %v118 = vld [vmem:[#allocation5 + $0x240] sm:$0xff]
    %v119 = vld [vmem:[#allocation5 + $0x248] sm:$0xff]
    %v120 = vld [vmem:[#allocation5 + $0x250] sm:$0xff]
    %v121 = vld [vmem:[#allocation5 + $0x258] sm:$0xff]
    %v122 = vld [vmem:[#allocation5 + $0x260] sm:$0xff]
    %v123 = vld [vmem:[#allocation5 + $0x268] sm:$0xff]
    %v124 = vld [vmem:[#allocation5 + $0x270] sm:$0xff]
    %v125 = vld [vmem:[#allocation5 + $0x278] sm:$0xff]
    %v126 = vld [vmem:[#allocation5 + $0x280] sm:$0xff]
    %v127 = vld [vmem:[#allocation5 + $0x288] sm:$0xff]
    %v128 = vld [vmem:[#allocation5 + $0x290] sm:$0xff]
    %v129 = vld [vmem:[#allocation5 + $0x298] sm:$0xff]
    %v130 = vld [vmem:[#allocation5 + $0x2a0] sm:$0xff]
    %v131 = vld [vmem:[#allocation5 + $0x2a8] sm:$0xff]
    %v132 = vld [vmem:[#allocation5 + $0x2b0] sm:$0xff]
    %v133 = vld [vmem:[#allocation5 + $0x2b8] sm:$0xff]
    %v134 = vld [vmem:[#allocation5 + $0x2c0] sm:$0xff]
    %v135 = vld [vmem:[#allocation5 + $0x2c8] sm:$0xff]
    %v136 = vld [vmem:[#allocation5 + $0x2d0] sm:$0xff]
    %v137 = vld [vmem:[#allocation5 + $0x2d8] sm:$0xff]
    %v138 = vld [vmem:[#allocation5 + $0x2e0] sm:$0xff]
    %v139 = vld [vmem:[#allocation5 + $0x2e8] sm:$0xff]
    %v140 = vld [vmem:[#allocation5 + $0x2f0] sm:$0xff]
    %v141 = vld [vmem:[#allocation5 + $0x2f8] sm:$0xff]
    %v142 = vld [vmem:[#allocation5 + $0x300] sm:$0xff]
    %v143 = vld [vmem:[#allocation5 + $0x308] sm:$0xff]
    %v144 = vld [vmem:[#allocation5 + $0x310] sm:$0xff]
    %v145 = vld [vmem:[#allocation5 + $0x318] sm:$0xff]
    %v146 = vld [vmem:[#allocation5 + $0x320] sm:$0xff]
    %v147 = vld [vmem:[#allocation5 + $0x328] sm:$0xff]
    %v148 = vld [vmem:[#allocation5 + $0x330] sm:$0xff]
    %v149 = vld [vmem:[#allocation5 + $0x338] sm:$0xff]
    %v150 = vld [vmem:[#allocation5 + $0x340] sm:$0xff]
    %v151 = vld [vmem:[#allocation5 + $0x348] sm:$0xff]
    %v152 = vld [vmem:[#allocation5 + $0x350] sm:$0xff]
    %v153 = vld [vmem:[#allocation5 + $0x358] sm:$0xff]
    %v154 = vld [vmem:[#allocation5 + $0x360] sm:$0xff]
    %v155 = vld [vmem:[#allocation5 + $0x368] sm:$0xff]
    %v156 = vld [vmem:[#allocation5 + $0x370] sm:$0xff]
    %v157 = vld [vmem:[#allocation5 + $0x378] sm:$0xff]
    %v158 = vld [vmem:[#allocation5 + $0x380] sm:$0xff]
    %v159 = vld [vmem:[#allocation5 + $0x388] sm:$0xff]
    %v160 = vld [vmem:[#allocation5 + $0x390] sm:$0xff]
    %v161 = vld [vmem:[#allocation5 + $0x398] sm:$0xff]
    %v162 = vld [vmem:[#allocation5 + $0x3a0] sm:$0xff]
    %v163 = vld [vmem:[#allocation5 + $0x3a8] sm:$0xff]
    %v164 = vld [vmem:[#allocation5 + $0x3b0] sm:$0xff]
    %v165 = vld [vmem:[#allocation5 + $0x3b8] sm:$0xff]
    %v166 = vld [vmem:[#allocation5 + $0x3c0] sm:$0xff]
    %v167 = vld [vmem:[#allocation5 + $0x3c8] sm:$0xff]
    %v168 = vld [vmem:[#allocation5 + $0x3d0] sm:$0xff]
    %v169 = vld [vmem:[#allocation5 + $0x3d8] sm:$0xff]
    %v170 = vld [vmem:[#allocation5 + $0x3e0] sm:$0xff]
    %v171 = vld [vmem:[#allocation5 + $0x3e8] sm:$0xff]
    %v172 = vld [vmem:[#allocation5 + $0x3f0] sm:$0xff]
    %v173 = vld [vmem:[#allocation5 + $0x3f8] sm:$0xff]
    %174 = vmatprep.subr.mxu0 0.0
    %175 = vmatpush1.msra.mxu0 %v61
    %176 = vmatprep.subr.mxu0 0.0
    %177 = vmatpush1.msra.mxu0 %v60
    %178 = vmatprep.subr.mxu0 0.0
    %179 = vmatpush1.msra.mxu0 %v59
    %180 = vmatprep.subr.mxu0 0.0
    %181 = vmatpush1.msra.mxu0 %v58
    %182 = vmatprep.subr.mxu0 0.0
    %183 = vmatpush1.msra.mxu0 %v57
    %184 = vmatprep.subr.mxu0 0.0
    %185 = vmatpush1.msra.mxu0 %v56
    %186 = vmatprep.subr.mxu0 0.0
    %187 = vmatpush1.msra.mxu0 %v55
    %188 = vmatprep.subr.mxu0 0.0
    %189 = vmatpush1.msra.mxu0 %v54
    %190 = vmatprep.subr.mxu0 0.0
    %191 = vmatpush1.msra.mxu0 %v53
    %192 = vmatprep.subr.mxu0 0.0
    %193 = vmatpush1.msra.mxu0 %v52
    %194 = vmatprep.subr.mxu0 0.0
    %195 = vmatpush1.msra.mxu0 %v51
    %196 = vmatprep.subr.mxu0 0.0
    %197 = vmatpush1.msra.mxu0 %v50
    %198 = vmatprep.subr.mxu0 0.0
    %199 = vmatpush1.msra.mxu0 %v49
    %200 = vmatprep.subr.mxu0 0.0
    %201 = vmatpush1.msra.mxu0 %v48
    %202 = vmatprep.subr.mxu0 0.0
    %203 = vmatpush1.msra.mxu0 %v47
    %204 = vmatprep.subr.mxu0 0.0
    %205 = vmatpush1.msra.mxu0 %v46
    %206 = vmatprep.subr.mxu0 0.0
    %207 = vmatpush2.msra.mxu0 %v77
    %208 = vmatprep.subr.mxu0 0.0
    %209 = vmatpush2.msra.mxu0 %v76
    %210 = vmatprep.subr.mxu0 0.0
    %211 = vmatpush2.msra.mxu0 %v75
    %212 = vmatprep.subr.mxu0 0.0
    %213 = vmatpush2.msra.mxu0 %v74
    %214 = vmatprep.subr.mxu0 0.0
    %215 = vmatpush2.msra.mxu0 %v73
    %216 = vmatprep.subr.mxu0 0.0
    %217 = vmatpush2.msra.mxu0 %v72
    %218 = vmatprep.subr.mxu0 0.0
    %219 = vmatpush2.msra.mxu0 %v71
    %220 = vmatprep.subr.mxu0 0.0
    %221 = vmatpush2.msra.mxu0 %v70
    %222 = vmatprep.subr.mxu0 0.0
    %223 = vmatpush2.msra.mxu0 %v69
    %224 = vmatprep.subr.mxu0 0.0
    %225 = vmatpush2.msra.mxu0 %v68
    %226 = vmatprep.subr.mxu0 0.0
    %227 = vmatpush2.msra.mxu0 %v67
    %228 = vmatprep.subr.mxu0 0.0
    %229 = vmatpush2.msra.mxu0 %v66
    %230 = vmatprep.subr.mxu0 0.0
    %231 = vmatpush2.msra.mxu0 %v65
    %232 = vmatprep.subr.mxu0 0.0
    %233 = vmatpush2.msra.mxu0 %v64
    %234 = vmatprep.subr.mxu0 0.0
    %235 = vmatpush2.msra.mxu0 %v63
    %236 = vmatprep.subr.mxu0 0.0
    %237 = vmatpush2.msra.mxu0 %v62
    %238 = vmatprep.mubr.f32.mxu0 %v39
    %239 = vmatmul.mubr.f32.gmra.mxu0 %v38
    %v240 = vpop.f32.mrf.mxu0
    %v241 = vadd.f32 0.0, %v240
    %v242 = vpop.f32.mrf.mxu0
    %243 = vdwg.mxu0
    %244 = vmatprep.subr.mxu0 0.0
    %245 = vmatpush1.msra.mxu0 %v93
    %246 = vmatprep.subr.mxu0 0.0
    %247 = vmatpush1.msra.mxu0 %v92
    %248 = vmatprep.subr.mxu0 0.0
    %249 = vmatpush1.msra.mxu0 %v91
    %250 = vmatprep.subr.mxu0 0.0
    %251 = vmatpush1.msra.mxu0 %v90
    %252 = vmatprep.subr.mxu0 0.0
    %253 = vmatpush1.msra.mxu0 %v89
    %254 = vmatprep.subr.mxu0 0.0
    %255 = vmatpush1.msra.mxu0 %v88
    %256 = vmatprep.subr.mxu0 0.0
    %257 = vmatpush1.msra.mxu0 %v87
    %258 = vmatprep.subr.mxu0 0.0
    %259 = vmatpush1.msra.mxu0 %v86
    %260 = vmatprep.subr.mxu0 0.0
    %261 = vmatpush1.msra.mxu0 %v85
    %262 = vmatprep.subr.mxu0 0.0
    %263 = vmatpush1.msra.mxu0 %v84
    %264 = vmatprep.subr.mxu0 0.0
    %265 = vmatpush1.msra.mxu0 %v83
    %266 = vmatprep.subr.mxu0 0.0
    %267 = vmatpush1.msra.mxu0 %v82
    %268 = vmatprep.subr.mxu0 0.0
    %269 = vmatpush1.msra.mxu0 %v81
    %270 = vmatprep.subr.mxu0 0.0
    %271 = vmatpush1.msra.mxu0 %v80
    %272 = vmatprep.subr.mxu0 0.0
    %273 = vmatpush1.msra.mxu0 %v79
    %274 = vmatprep.subr.mxu0 0.0
    %275 = vmatpush1.msra.mxu0 %v78
    %276 = vmatprep.subr.mxu0 0.0
    %277 = vmatpush2.msra.mxu0 %v109
    %278 = vmatprep.subr.mxu0 0.0
    %279 = vmatpush2.msra.mxu0 %v108
    %280 = vmatprep.subr.mxu0 0.0
    %281 = vmatpush2.msra.mxu0 %v107
    %282 = vmatprep.subr.mxu0 0.0
    %283 = vmatpush2.msra.mxu0 %v106
    %284 = vmatprep.subr.mxu0 0.0
    %285 = vmatpush2.msra.mxu0 %v105
    %286 = vmatprep.subr.mxu0 0.0
    %287 = vmatpush2.msra.mxu0 %v104
    %288 = vmatprep.subr.mxu0 0.0
    %289 = vmatpush2.msra.mxu0 %v103
    %290 = vmatprep.subr.mxu0 0.0
    %291 = vmatpush2.msra.mxu0 %v102
    %292 = vmatprep.subr.mxu0 0.0
    %293 = vmatpush2.msra.mxu0 %v101
    %294 = vmatprep.subr.mxu0 0.0
    %295 = vmatpush2.msra.mxu0 %v100
    %296 = vmatprep.subr.mxu0 0.0
    %297 = vmatpush2.msra.mxu0 %v99
    %298 = vmatprep.subr.mxu0 0.0
    %299 = vmatpush2.msra.mxu0 %v98
    %300 = vmatprep.subr.mxu0 0.0
    %301 = vmatpush2.msra.mxu0 %v97
    %302 = vmatprep.subr.mxu0 0.0
    %303 = vmatpush2.msra.mxu0 %v96
    %304 = vmatprep.subr.mxu0 0.0
    %305 = vmatpush2.msra.mxu0 %v95
    %306 = vmatprep.subr.mxu0 0.0
    %307 = vmatpush2.msra.mxu0 %v94
    %308 = vmatprep.mubr.f32.mxu0 %v41
    %309 = vmatmul.mubr.f32.gmra.mxu0 %v40
    %v310 = vpop.f32.mrf.mxu0
    %v311 = vadd.f32 %v241, %v310
    %v312 = vpop.f32.mrf.mxu0
    %313 = vdwg.mxu0
    %314 = vmatprep.subr.mxu0 0.0
    %315 = vmatpush1.msra.mxu0 %v125
    %316 = vmatprep.subr.mxu0 0.0
    %317 = vmatpush1.msra.mxu0 %v124
    %318 = vmatprep.subr.mxu0 0.0
    %319 = vmatpush1.msra.mxu0 %v123
    %320 = vmatprep.subr.mxu0 0.0
    %321 = vmatpush1.msra.mxu0 %v122
    %322 = vmatprep.subr.mxu0 0.0
    %323 = vmatpush1.msra.mxu0 %v121
    %324 = vmatprep.subr.mxu0 0.0
    %325 = vmatpush1.msra.mxu0 %v120
    %326 = vmatprep.subr.mxu0 0.0
    %327 = vmatpush1.msra.mxu0 %v119
    %328 = vmatprep.subr.mxu0 0.0
    %329 = vmatpush1.msra.mxu0 %v118
    %330 = vmatprep.subr.mxu0 0.0
    %331 = vmatpush1.msra.mxu0 %v117
    %332 = vmatprep.subr.mxu0 0.0
    %333 = vmatpush1.msra.mxu0 %v116
    %334 = vmatprep.subr.mxu0 0.0
    %335 = vmatpush1.msra.mxu0 %v115
    %336 = vmatprep.subr.mxu0 0.0
    %337 = vmatpush1.msra.mxu0 %v114
    %338 = vmatprep.subr.mxu0 0.0
    %339 = vmatpush1.msra.mxu0 %v113
    %340 = vmatprep.subr.mxu0 0.0
    %341 = vmatpush1.msra.mxu0 %v112
    %342 = vmatprep.subr.mxu0 0.0
    %343 = vmatpush1.msra.mxu0 %v111
    %344 = vmatprep.subr.mxu0 0.0
    %345 = vmatpush1.msra.mxu0 %v110
    %346 = vmatprep.subr.mxu0 0.0
    %347 = vmatpush2.msra.mxu0 %v141
    %348 = vmatprep.subr.mxu0 0.0
    %349 = vmatpush2.msra.mxu0 %v140
    %350 = vmatprep.subr.mxu0 0.0
    %351 = vmatpush2.msra.mxu0 %v139
    %352 = vmatprep.subr.mxu0 0.0
    %353 = vmatpush2.msra.mxu0 %v138
    %354 = vmatprep.subr.mxu0 0.0
    %355 = vmatpush2.msra.mxu0 %v137
    %356 = vmatprep.subr.mxu0 0.0
    %357 = vmatpush2.msra.mxu0 %v136
    %358 = vmatprep.subr.mxu0 0.0
    %359 = vmatpush2.msra.mxu0 %v135
    %360 = vmatprep.subr.mxu0 0.0
    %361 = vmatpush2.msra.mxu0 %v134
    %362 = vmatprep.subr.mxu0 0.0
    %363 = vmatpush2.msra.mxu0 %v133
    %364 = vmatprep.subr.mxu0 0.0
    %365 = vmatpush2.msra.mxu0 %v132
    %366 = vmatprep.subr.mxu0 0.0
    %367 = vmatpush2.msra.mxu0 %v131
    %368 = vmatprep.subr.mxu0 0.0
    %369 = vmatpush2.msra.mxu0 %v130
    %370 = vmatprep.subr.mxu0 0.0
    %371 = vmatpush2.msra.mxu0 %v129
    %372 = vmatprep.subr.mxu0 0.0
    %373 = vmatpush2.msra.mxu0 %v128
    %374 = vmatprep.subr.mxu0 0.0
    %375 = vmatpush2.msra.mxu0 %v127
    %376 = vmatprep.subr.mxu0 0.0
    %377 = vmatpush2.msra.mxu0 %v126
    %378 = vmatprep.mubr.f32.mxu0 %v43
    %379 = vmatmul.mubr.f32.gmra.mxu0 %v42
    %v380 = vpop.f32.mrf.mxu0
    %v381 = vadd.f32 %v311, %v380
    %v382 = vpop.f32.mrf.mxu0
    %383 = vdwg.mxu0
    %384 = vmatprep.subr.mxu0 0.0
    %385 = vmatpush1.msra.mxu0 %v157
    %386 = vmatprep.subr.mxu0 0.0
    %387 = vmatpush1.msra.mxu0 %v156
    %388 = vmatprep.subr.mxu0 0.0
    %389 = vmatpush1.msra.mxu0 %v155
    %390 = vmatprep.subr.mxu0 0.0
    %391 = vmatpush1.msra.mxu0 %v154
    %392 = vmatprep.subr.mxu0 0.0
    %393 = vmatpush1.msra.mxu0 %v153
    %394 = vmatprep.subr.mxu0 0.0
    %395 = vmatpush1.msra.mxu0 %v152
    %396 = vmatprep.subr.mxu0 0.0
    %397 = vmatpush1.msra.mxu0 %v151
    %398 = vmatprep.subr.mxu0 0.0
    %399 = vmatpush1.msra.mxu0 %v150
    %400 = vmatprep.subr.mxu0 0.0
    %401 = vmatpush1.msra.mxu0 %v149
    %402 = vmatprep.subr.mxu0 0.0
    %403 = vmatpush1.msra.mxu0 %v148
    %404 = vmatprep.subr.mxu0 0.0
    %405 = vmatpush1.msra.mxu0 %v147
    %406 = vmatprep.subr.mxu0 0.0
    %407 = vmatpush1.msra.mxu0 %v146
    %408 = vmatprep.subr.mxu0 0.0
    %409 = vmatpush1.msra.mxu0 %v145
    %410 = vmatprep.subr.mxu0 0.0
    %411 = vmatpush1.msra.mxu0 %v144
    %412 = vmatprep.subr.mxu0 0.0
    %413 = vmatpush1.msra.mxu0 %v143
    %414 = vmatprep.subr.mxu0 0.0
    %415 = vmatpush1.msra.mxu0 %v142
    %416 = vmatprep.subr.mxu0 0.0
    %417 = vmatpush2.msra.mxu0 %v173
    %418 = vmatprep.subr.mxu0 0.0
    %419 = vmatpush2.msra.mxu0 %v172
    %420 = vmatprep.subr.mxu0 0.0
    %421 = vmatpush2.msra.mxu0 %v171
    %422 = vmatprep.subr.mxu0 0.0
    %423 = vmatpush2.msra.mxu0 %v170
    %424 = vmatprep.subr.mxu0 0.0
    %425 = vmatpush2.msra.mxu0 %v169
    %426 = vmatprep.subr.mxu0 0.0
    %427 = vmatpush2.msra.mxu0 %v168
    %428 = vmatprep.subr.mxu0 0.0
    %429 = vmatpush2.msra.mxu0 %v167
    %430 = vmatprep.subr.mxu0 0.0
    %431 = vmatpush2.msra.mxu0 %v166
    %432 = vmatprep.subr.mxu0 0.0
    %433 = vmatpush2.msra.mxu0 %v165
    %434 = vmatprep.subr.mxu0 0.0
    %435 = vmatpush2.msra.mxu0 %v164
    %436 = vmatprep.subr.mxu0 0.0
    %437 = vmatpush2.msra.mxu0 %v163
    %438 = vmatprep.subr.mxu0 0.0
    %439 = vmatpush2.msra.mxu0 %v162
    %440 = vmatprep.subr.mxu0 0.0
    %441 = vmatpush2.msra.mxu0 %v161
    %442 = vmatprep.subr.mxu0 0.0
    %443 = vmatpush2.msra.mxu0 %v160
    %444 = vmatprep.subr.mxu0 0.0
    %445 = vmatpush2.msra.mxu0 %v159
    %446 = vmatprep.subr.mxu0 0.0
    %447 = vmatpush2.msra.mxu0 %v158
    %448 = vmatprep.mubr.f32.mxu0 %v45
    %449 = vmatmul.mubr.f32.gmra.mxu0 %v44
    %v450 = vpop.f32.mrf.mxu0
    %v451 = vadd.f32 %v381, %v450
    %v452 = vpop.f32.mrf.mxu0
    %453 = vdwg.mxu0
    %v454 = vmul.f32 %v451, 0.01
    %v455 = vmax.f32 %v451, %v454
    %456 = vst [vmem:[#allocation7] sm:$0xff] %v455
    // Predicated region
    $region18: #{tpu_custom_call.1} parent=1 // pred_check
      _
    $region19: #{tpu_custom_call.1} parent=1 // pred_check_branch
      %458 = sbr.rel (0) target = $region21
    $region20: #{tpu_custom_call.1} parent=1 // pred_region
      %s460 = ssub.s32 128, 128
      %461 = vsyncadd [#allocation4], %s460
      %s463 = sshll.u32 [#allocation7], 4
      %s464 = int_to_ptr.vmem [resolvable:$true] %s463
      %466 = dma.vmem_to_hbm [thread:$0]  %s464, 128, %s2, [#allocation4]
    $region21: #{tpu_custom_call.1} parent=1 // pred_fallthru
      _
    // Predicated region
    $region22: #{tpu_custom_call.1} parent=1 // pred_check
      _
    $region23: #{tpu_custom_call.1} parent=1 // pred_check_branch
      %468 = sbr.rel (0) target = $region25
    $region24: #{tpu_custom_call.1} parent=1 // pred_region
      %469 = dma.done [#allocation4], 128
    $region25: #{tpu_custom_call.1} parent=1 // pred_fallthru
      _
    %470 = vsyncpa [#allocation3], 1
    %471 = vsyncpa [#allocation6], 1
    %472 = vsyncpa [#allocation4], 1

</llo_original>
